<compile_context>
chip_gen: v6e
topology: v6e:2x2x1
jax: 0.10.0
libtpu: 0.0.40
codegen_flags: <defaults>
</compile_context>

<pallas_src>
import jax
import jax.numpy as jnp
from jax import lax
from jax.experimental import pallas as pl
from jax.experimental.pallas import tpu as pltpu


def _round_up(x: int, m: int) -> int:
    return ((x + m - 1) // m) * m


def _linear_kernel(x_ref, w_ref, b_ref, o_ref, acc_ref):
    # x_ref: (tm, tk)   w_ref: (tn, tk)   b_ref: (1, tn)
    # o_ref: (tm, tn)   acc_ref: (tm, tn) f32 scratch
    k = pl.program_id(2)

    @pl.when(k == 0)
    def _():
        acc_ref[...] = jnp.zeros_like(acc_ref)

    # out[m, n] += sum_k x[m, k] * w[n, k]  -- weight stays in PyTorch layout.
    acc_ref[...] += lax.dot_general(
        x_ref[...],
        w_ref[...],
        dimension_numbers=(((1,), (1,)), ((), ())),
        preferred_element_type=jnp.float32,
    )

    @pl.when(k == pl.num_programs(2) - 1)
    def _():
        o_ref[...] = (acc_ref[...] + b_ref[...].astype(jnp.float32)).astype(
            o_ref.dtype
        )


def random_dummy_model_forward(
    X,
    weight,
    bias,
    *,
    compute_dtype=None,   # e.g. jnp.bfloat16 to halve streamed weight bytes
    out_dtype=None,
    tm=128,
    tn=512,
    tk=2048,
):
    """Equivalent of RandomDummyModel.forward.

    X:      (B, ...) with prod(trailing dims) == n_inputs
    weight: (n_outputs, n_inputs)  -- PyTorch nn.Linear convention
    bias:   (n_outputs,)
    """
    B = X.shape[0]
    n_outputs, n_inputs = weight.shape
    out_dtype = out_dtype or X.dtype
    compute_dtype = compute_dtype or X.dtype

    flattened = X.reshape(B, -1)  # row-major == torch.flatten(start_dim=1)
    assert flattened.shape == (B, n_inputs), (
        f"input has incorrect shape, expected {n_inputs} elements per sample, "
        f"got {flattened.shape[1]} (input shape {X.shape})"
    )

    # --- pad to TPU-friendly tile multiples ---------------------------------
    M_pad = _round_up(B, 8)              # sublane multiple
    N_pad = _round_up(n_outputs, 128)    # lane-dense output stores
    K_pad = _round_up(n_inputs, 128)

    tm = min(tm, M_pad)
    tn = min(tn, N_pad)
    tk = min(tk, K_pad)
    M_pad = _round_up(M_pad, tm)
    N_pad = _round_up(N_pad, tn)
    K_pad = _round_up(K_pad, tk)

    x_p = jnp.pad(
        flattened.astype(compute_dtype),
        ((0, M_pad - B), (0, K_pad - n_inputs)),
    )
    w_p = jnp.pad(
        weight.astype(compute_dtype),
        ((0, N_pad - n_outputs), (0, K_pad - n_inputs)),
    )
    b_p = jnp.pad(bias.astype(jnp.float32), (0, N_pad - n_outputs)).reshape(
        1, N_pad
    )

    grid = (M_pad // tm, N_pad // tn, K_pad // tk)

    # --- VMEM budget (double-buffered inputs + f32 accumulator + output) ----
    in_bytes = jnp.dtype(compute_dtype).itemsize
    out_bytes = jnp.dtype(out_dtype).itemsize
    vmem_needed = (
        2 * (tm * tk + tn * tk) * in_bytes  # double-buffered x / w tiles
        + 2 * tn * 4                        # bias tile
        + tm * tn * 4                       # accumulator scratch
        + 2 * tm * tn * out_bytes           # double-buffered output tile
    )
    vmem_limit = min(max(int(1.25 * vmem_needed) + (2 << 20), 4 << 20), 64 << 20)

    cost = pl.CostEstimate(
        flops=2 * M_pad * N_pad * K_pad,
        transcendentals=0,
        bytes_accessed=(
            (M_pad * K_pad + N_pad * K_pad) * in_bytes
            + N_pad * 4
            + M_pad * N_pad * out_bytes
        ),
    )

    out_padded = pl.pallas_call(
        _linear_kernel,
        out_shape=jax.ShapeDtypeStruct((M_pad, N_pad), out_dtype),
        grid_spec=pltpu.PrefetchScalarGridSpec(
            num_scalar_prefetch=0,
            grid=grid,
            in_specs=[
                pl.BlockSpec((tm, tk), lambda i, j, k: (i, k)),   # x
                pl.BlockSpec((tn, tk), lambda i, j, k: (j, k)),   # weight (N,K)
                pl.BlockSpec((1, tn), lambda i, j, k: (0, j)),    # bias
            ],
            out_specs=pl.BlockSpec((tm, tn), lambda i, j, k: (i, j)),
            scratch_shapes=[pltpu.VMEM((tm, tn), jnp.float32)],
        ),
        compiler_params=pltpu.CompilerParams(
            dimension_semantics=("parallel", "parallel", "arbitrary"),
            vmem_limit_bytes=vmem_limit,
        ),
        cost_estimate=cost,
    )(x_p, w_p, b_p)

    return out_padded[:B, :n_outputs]


if __name__ == "__main__":
    # Shapes consistent with the module: X is (B, C, H, W);
    # n_inputs = C*H*W, n_outputs = hidden size of the Linear layer.
    B, C, H, W = 2, 4, 16, 16
    n_inputs = C * H * W  # 1024
    n_outputs = 32

    key = jax.random.PRNGKey(0)
    kx, kw, kb = jax.random.split(key, 3)

    X = jax.random.normal(kx, (B, C, H, W), dtype=jnp.float32)

    # Deterministic parameter init (mimics torch.nn.Linear uniform bound).
    bound = 1.0 / (n_inputs ** 0.5)
    weight = jax.random.uniform(
        kw, (n_outputs, n_inputs), minval=-bound, maxval=bound, dtype=jnp.float32
    )
    bias = jax.random.uniform(
        kb, (n_outputs,), minval=-bound, maxval=bound, dtype=jnp.float32
    )

    # --- f32 path: must match the PyTorch-equivalent reference tightly ------
    out = random_dummy_model_forward(X, weight, bias)
    jax.block_until_ready(out)

    ref = X.reshape(B, -1) @ weight.T + bias
    assert out.shape == (B, n_outputs)
    assert jnp.allclose(out, ref, atol=1e-5, rtol=1e-5), "f32 mismatch"

    # --- bf16 weight-streaming path (f32 accumulate / bias add) -------------
    out_bf16 = random_dummy_model_forward(
        X, weight, bias, compute_dtype=jnp.bfloat16, out_dtype=jnp.float32
    )
    jax.block_until_ready(out_bf16)

    x_r = X.reshape(B, -1).astype(jnp.bfloat16).astype(jnp.float32)
    w_r = weight.astype(jnp.bfloat16).astype(jnp.float32)
    ref_bf16 = x_r @ w_r.T + bias
    assert jnp.allclose(out_bf16, ref_bf16, atol=2e-3, rtol=2e-3), "bf16 mismatch"

    print("KERNEL_OK")
</pallas_src>

<mosaic_0001>
module attributes {stable_mosaic.version = 11 : i64} {
  func.func @_linear_kernel(%arg0: i32, %arg1: i32, %arg2: i32, %arg3: memref<8x1024xf32, #tpu.memory_space<vmem>>, %arg4: memref<128x1024xf32, #tpu.memory_space<vmem>>, %arg5: memref<1x128xf32, #tpu.memory_space<vmem>>, %arg6: memref<8x128xf32, #tpu.memory_space<vmem>>, %arg7: memref<8x128xf32, #tpu.memory_space<vmem>>) attributes {dimension_semantics = [#tpu.dimension_semantics<parallel>, #tpu.dimension_semantics<parallel>, #tpu.dimension_semantics<arbitrary>], iteration_bounds = array<i64: 1, 1, 1>, scalar_prefetch = 0 : i64, scratch_operands = 1 : i64, tpu.core_type = #tpu.core_type<tc>, window_params = [{transform_indices = @transform_0, window_bounds = array<i64: 8, 1024>}, {transform_indices = @transform_1, window_bounds = array<i64: 128, 1024>}, {transform_indices = @transform_2, window_bounds = array<i64: 1, 128>}, {transform_indices = @transform_3, window_bounds = array<i64: 8, 128>}]} {
    %c0_i32 = arith.constant 0 : i32
    %0 = arith.cmpi eq, %arg2, %c0_i32 : i32
    %1 = arith.extui %0 : i1 to i32
    %c0_i32_0 = arith.constant 0 : i32
    %2 = arith.cmpi ne, %1, %c0_i32_0 : i32
    scf.if %2 {
      %cst_10 = arith.constant 0.000000e+00 : f32
      %12 = vector.broadcast %cst_10 : f32 to vector<8x128xf32>
      %c0_11 = arith.constant 0 : index
      %c0_12 = arith.constant 0 : index
      %13 = vector.load %arg7[%c0_11, %c0_12] : memref<8x128xf32, #tpu.memory_space<vmem>>, vector<8x128xf32>
      tpu.vector_store %arg7[%c0_11, %c0_12], %12 {strides = array<i32>} : memref<8x128xf32, #tpu.memory_space<vmem>>, vector<8x128xf32>,
    } else {
    }
    %c0 = arith.constant 0 : index
    %c0_1 = arith.constant 0 : index
    %3 = vector.load %arg7[%c0, %c0_1] : memref<8x128xf32, #tpu.memory_space<vmem>>, vector<8x128xf32>
    %c0_2 = arith.constant 0 : index
    %c0_3 = arith.constant 0 : index
    %4 = vector.load %arg3[%c0_2, %c0_3] : memref<8x1024xf32, #tpu.memory_space<vmem>>, vector<8x1024xf32>
    %c0_4 = arith.constant 0 : index
    %c0_5 = arith.constant 0 : index
    %5 = vector.load %arg4[%c0_4, %c0_5] : memref<128x1024xf32, #tpu.memory_space<vmem>>, vector<128x1024xf32>
    %cst = arith.constant dense<0.000000e+00> : vector<8x128xf32>
    %6 = tpu.matmul %4, %5, %cst {dimension_numbers = #tpu.dot_dimension_numbers<[1], [1], [0], [0], [0, 0, 1, 0], [], []>} : vector<8x1024xf32>, vector<128x1024xf32>, vector<8x128xf32> -> vector<8x128xf32>
    %7 = arith.addf %3, %6 : vector<8x128xf32>
    %c0_6 = arith.constant 0 : index
    %c0_7 = arith.constant 0 : index
    %8 = vector.load %arg7[%c0_6, %c0_7] : memref<8x128xf32, #tpu.memory_space<vmem>>, vector<8x128xf32>
    tpu.vector_store %arg7[%c0_6, %c0_7], %7 {strides = array<i32>} : memref<8x128xf32, #tpu.memory_space<vmem>>, vector<8x128xf32>,
    %c0_i32_8 = arith.constant 0 : i32
    %9 = arith.cmpi eq, %arg2, %c0_i32_8 : i32
    %10 = arith.extui %9 : i1 to i32
    %c0_i32_9 = arith.constant 0 : i32
    %11 = arith.cmpi ne, %10, %c0_i32_9 : i32
    scf.if %11 {
      %c0_10 = arith.constant 0 : index
      %c0_11 = arith.constant 0 : index
      %12 = vector.load %arg7[%c0_10, %c0_11] : memref<8x128xf32, #tpu.memory_space<vmem>>, vector<8x128xf32>
      %c0_12 = arith.constant 0 : index
      %c0_13 = arith.constant 0 : index
      %13 = vector.load %arg5[%c0_12, %c0_13] : memref<1x128xf32, #tpu.memory_space<vmem>>, vector<1x128xf32>
      %14 = vector.broadcast %13 : vector<1x128xf32> to vector<8x128xf32>
      %15 = arith.addf %12, %14 : vector<8x128xf32>
      %c0_14 = arith.constant 0 : index
      %c0_15 = arith.constant 0 : index
      %16 = vector.load %arg6[%c0_14, %c0_15] : memref<8x128xf32, #tpu.memory_space<vmem>>, vector<8x128xf32>
      tpu.vector_store %arg6[%c0_14, %c0_15], %15 {strides = array<i32>} : memref<8x128xf32, #tpu.memory_space<vmem>>, vector<8x128xf32>,
    } else {
    }
    return
  }
  func.func @transform_0(%arg0: i32, %arg1: i32, %arg2: i32) -> (i32, i32) {
    %c0_i32 = arith.constant 0 : i32
    return %arg0, %arg2 : i32, i32
  }
  func.func @transform_1(%arg0: i32, %arg1: i32, %arg2: i32) -> (i32, i32) {
    %c0_i32 = arith.constant 0 : i32
    return %arg1, %arg2 : i32, i32
  }
  func.func @transform_2(%arg0: i32, %arg1: i32, %arg2: i32) -> (i32, i32) {
    %c0_i32 = arith.constant 0 : i32
    %c0_i32_0 = arith.constant 0 : i32
    return %c0_i32, %arg1 : i32, i32
  }
  func.func @transform_3(%arg0: i32, %arg1: i32, %arg2: i32) -> (i32, i32) {
    %c0_i32 = arith.constant 0 : i32
    return %arg0, %arg1 : i32, i32
  }
}

</mosaic_0001>

<llo_original>
// kernel: tpu_custom_call.1
$region0: #{tpu_custom_call.1}
  #allocation0 [shape = 'u32[]', space=smem, size = 0x4, offset = 0x4, fixed_abs, tag = 'smem constant byte address 0x4 - core index']
  #allocation1 [shape = 'u32[144,128]{1,0:T(1,128)}', space=vmem, size = 0x12000, scoped, tag = 'internal scratch']
  #allocation2 [shape = 'f32[8,128]{1,0:T(8,128)}', space=vmem, size = 0x1000, scoped, tag = 'scratch operand']
  %s0 = inlined_call_operand.hbm [shape: f32[8,1024], index: 0, kind: input, shape index: {}]
  %s1 = inlined_call_operand.hbm [shape: f32[128,1024], index: 1, kind: input, shape index: {}]
  %s2 = inlined_call_operand.vmem [shape: f32[1,128], index: 2, kind: input, shape index: {}]
  %s3 = inlined_call_operand.hbm [shape: f32[8,128], index: 3, kind: output, shape index: {}]
  %s4 = sld [smem:[#allocation0]]
  $region38: #{tpu_custom_call.1} parent=0
    _
  %s6 = ssub.s32 1, %s4
  %s7 = scalar_select 0, %s6, %s4
  $region1: #{tpu_custom_call.1} parent=0
    #allocation3 [shape = 'u8[32768]{0}', space=vmem, size = 0x8000, scoped, tag = 'input window, operand 0, single buffered']
    #allocation4 [shape = 's32[1]{0}', space=sflag, size = 0x4, scoped, tag = 'scoped memory for tpu_custom_call.1']
    #allocation5 [shape = 's32[1]{0}', space=sflag, size = 0x4, scoped, tag = 'scoped memory for tpu_custom_call.1']
    #allocation6 [shape = 'u8[524288]{0}', space=vmem, size = 0x80000, scoped, tag = 'input window, operand 1, single buffered']
    #allocation7 [shape = 's32[1]{0}', space=sflag, size = 0x4, scoped, tag = 'scoped memory for tpu_custom_call.1']
    #allocation8 [shape = 'u8[4096]{0}', space=vmem, size = 0x1000, scoped, tag = 'output window, operand 0, single buffered']
    %8 = vsyncpa [#allocation4], 0
    %9 = vsyncpa [#allocation7], 0
    %10 = vsyncpa [#allocation5], 0
    // Predicated region
    $region2: #{tpu_custom_call.1} parent=1 // pred_check
      _
    $region3: #{tpu_custom_call.1} parent=1 // pred_check_branch
      %12 = sbr.rel (0) target = $region5
    $region4: #{tpu_custom_call.1} parent=1 // pred_region
      %s14 = ssub.s32 1024, 1024
      %15 = vsyncadd [#allocation4], %s14
      %s17 = sshll.u32 [#allocation3], 4
      %s18 = int_to_ptr.vmem [resolvable:$true] %s17
      %20 = dma.hbm_to_vmem [thread:$0]  %s0, 1024, %s18, [#allocation4]
    $region5: #{tpu_custom_call.1} parent=1 // pred_fallthru
      _
    // Predicated region
    $region6: #{tpu_custom_call.1} parent=1 // pred_check
      _
    $region7: #{tpu_custom_call.1} parent=1 // pred_check_branch
      %22 = sbr.rel (0) target = $region9
    $region8: #{tpu_custom_call.1} parent=1 // pred_region
      %s24 = ssub.s32 16384, 16384
      %25 = vsyncadd [#allocation7], %s24
      %s26 = sshll.u32 [#allocation6], 4
      %s27 = int_to_ptr.vmem [resolvable:$true] %s26
      %32 = dma.hbm_to_vmem [thread:$0]  %s1, 16384, %s27, [#allocation7], 1024, 1024, 64
    $region9: #{tpu_custom_call.1} parent=1 // pred_fallthru
      _
    // Predicated region
    $region10: #{tpu_custom_call.1} parent=1 // pred_check
      _
    $region11: #{tpu_custom_call.1} parent=1 // pred_check_branch
      %34 = sbr.rel (0) target = $region13
    $region12: #{tpu_custom_call.1} parent=1 // pred_region
      _
    $region13: #{tpu_custom_call.1} parent=1 // pred_fallthru
      _
    // Predicated region
    $region14: #{tpu_custom_call.1} parent=1 // pred_check
      _
    $region15: #{tpu_custom_call.1} parent=1 // pred_check_branch
      %36 = sbr.rel (0) target = $region17
    $region16: #{tpu_custom_call.1} parent=1 // pred_region
      %37 = dma.done [#allocation4], 1024
    $region17: #{tpu_custom_call.1} parent=1 // pred_fallthru
      _
    // Predicated region
    $region18: #{tpu_custom_call.1} parent=1 // pred_check
      _
    $region19: #{tpu_custom_call.1} parent=1 // pred_check_branch
      %39 = sbr.rel (0) target = $region21
    $region20: #{tpu_custom_call.1} parent=1 // pred_region
      %40 = dma.done [#allocation7], 16384
    $region21: #{tpu_custom_call.1} parent=1 // pred_fallthru
      _
    %p41 = scmp.eq.s32.totalorder 0, 0
    // Predicated region
    $region22: #{tpu_custom_call.1} parent=1 // pred_check
      %p42 = pneg %p41
    $region23: #{tpu_custom_call.1} parent=1 // pred_check_branch
      %44 = sbr.rel (%p42) target = $region25
    $region24: #{tpu_custom_call.1} parent=1 // pred_region
      %45 = vst [vmem:[#allocation2] sm:$0xff] 0.0
    $region25: #{tpu_custom_call.1} parent=1 // pred_fallthru
      _
    %v46 = vld [vmem:[#allocation2] sm:$0xff]
    %v47 = vld [vmem:[#allocation3] sm:$0xff]
    %v48 = vld [vmem:[#allocation3 + $0x8] sm:$0xff]
    %v49 = vld [vmem:[#allocation3 + $0x10] sm:$0xff]
    %v50 = vld [vmem:[#allocation3 + $0x18] sm:$0xff]
    %v51 = vld [vmem:[#allocation3 + $0x20] sm:$0xff]
    %v52 = vld [vmem:[#allocation3 + $0x28] sm:$0xff]
    %v53 = vld [vmem:[#allocation3 + $0x30] sm:$0xff]
    %v54 = vld [vmem:[#allocation3 + $0x38] sm:$0xff]
    %v55 = vld [vmem:[#allocation6] sm:$0xff]
    %v56 = vld [vmem:[#allocation6 + $0x8] sm:$0xff]
    %v57 = vld [vmem:[#allocation6 + $0x10] sm:$0xff]
    %v58 = vld [vmem:[#allocation6 + $0x18] sm:$0xff]
    %v59 = vld [vmem:[#allocation6 + $0x20] sm:$0xff]
    %v60 = vld [vmem:[#allocation6 + $0x28] sm:$0xff]
    %v61 = vld [vmem:[#allocation6 + $0x30] sm:$0xff]
    %v62 = vld [vmem:[#allocation6 + $0x38] sm:$0xff]
    %v63 = vld [vmem:[#allocation6 + $0x40] sm:$0xff]
    %v64 = vld [vmem:[#allocation6 + $0x48] sm:$0xff]
    %v65 = vld [vmem:[#allocation6 + $0x50] sm:$0xff]
    %v66 = vld [vmem:[#allocation6 + $0x58] sm:$0xff]
    %v67 = vld [vmem:[#allocation6 + $0x60] sm:$0xff]
    %v68 = vld [vmem:[#allocation6 + $0x68] sm:$0xff]
    %v69 = vld [vmem:[#allocation6 + $0x70] sm:$0xff]
    %v70 = vld [vmem:[#allocation6 + $0x78] sm:$0xff]
    %v71 = vld [vmem:[#allocation6 + $0x80] sm:$0xff]
    %v72 = vld [vmem:[#allocation6 + $0x88] sm:$0xff]
    %v73 = vld [vmem:[#allocation6 + $0x90] sm:$0xff]
    %v74 = vld [vmem:[#allocation6 + $0x98] sm:$0xff]
    %v75 = vld [vmem:[#allocation6 + $0xa0] sm:$0xff]
    %v76 = vld [vmem:[#allocation6 + $0xa8] sm:$0xff]
    %v77 = vld [vmem:[#allocation6 + $0xb0] sm:$0xff]
    %v78 = vld [vmem:[#allocation6 + $0xb8] sm:$0xff]
    %v79 = vld [vmem:[#allocation6 + $0xc0] sm:$0xff]
    %v80 = vld [vmem:[#allocation6 + $0xc8] sm:$0xff]
    %v81 = vld [vmem:[#allocation6 + $0xd0] sm:$0xff]
    %v82 = vld [vmem:[#allocation6 + $0xd8] sm:$0xff]
    %v83 = vld [vmem:[#allocation6 + $0xe0] sm:$0xff]
    %v84 = vld [vmem:[#allocation6 + $0xe8] sm:$0xff]
    %v85 = vld [vmem:[#allocation6 + $0xf0] sm:$0xff]
    %v86 = vld [vmem:[#allocation6 + $0xf8] sm:$0xff]
    %v87 = vld [vmem:[#allocation6 + $0x100] sm:$0xff]
    %v88 = vld [vmem:[#allocation6 + $0x108] sm:$0xff]
    %v89 = vld [vmem:[#allocation6 + $0x110] sm:$0xff]
    %v90 = vld [vmem:[#allocation6 + $0x118] sm:$0xff]
    %v91 = vld [vmem:[#allocation6 + $0x120] sm:$0xff]
    %v92 = vld [vmem:[#allocation6 + $0x128] sm:$0xff]
    %v93 = vld [vmem:[#allocation6 + $0x130] sm:$0xff]
    %v94 = vld [vmem:[#allocation6 + $0x138] sm:$0xff]
    %v95 = vld [vmem:[#allocation6 + $0x140] sm:$0xff]
    %v96 = vld [vmem:[#allocation6 + $0x148] sm:$0xff]
    %v97 = vld [vmem:[#allocation6 + $0x150] sm:$0xff]
    %v98 = vld [vmem:[#allocation6 + $0x158] sm:$0xff]
    %v99 = vld [vmem:[#allocation6 + $0x160] sm:$0xff]
    %v100 = vld [vmem:[#allocation6 + $0x168] sm:$0xff]
    %v101 = vld [vmem:[#allocation6 + $0x170] sm:$0xff]
    %v102 = vld [vmem:[#allocation6 + $0x178] sm:$0xff]
    %v103 = vld [vmem:[#allocation6 + $0x180] sm:$0xff]
    %v104 = vld [vmem:[#allocation6 + $0x188] sm:$0xff]
    %v105 = vld [vmem:[#allocation6 + $0x190] sm:$0xff]
    %v106 = vld [vmem:[#allocation6 + $0x198] sm:$0xff]
    %v107 = vld [vmem:[#allocation6 + $0x1a0] sm:$0xff]
    %v108 = vld [vmem:[#allocation6 + $0x1a8] sm:$0xff]
    %v109 = vld [vmem:[#allocation6 + $0x1b0] sm:$0xff]
    %v110 = vld [vmem:[#allocation6 + $0x1b8] sm:$0xff]
    %v111 = vld [vmem:[#allocation6 + $0x1c0] sm:$0xff]
    %v112 = vld [vmem:[#allocation6 + $0x1c8] sm:$0xff]
    %v113 = vld [vmem:[#allocation6 + $0x1d0] sm:$0xff]
    %v114 = vld [vmem:[#allocation6 + $0x1d8] sm:$0xff]
    %v115 = vld [vmem:[#allocation6 + $0x1e0] sm:$0xff]
    %v116 = vld [vmem:[#allocation6 + $0x1e8] sm:$0xff]
    %v117 = vld [vmem:[#allocation6 + $0x1f0] sm:$0xff]
    %v118 = vld [vmem:[#allocation6 + $0x1f8] sm:$0xff]
    %v119 = vld [vmem:[#allocation6 + $0x200] sm:$0xff]
    %v120 = vld [vmem:[#allocation6 + $0x208] sm:$0xff]
    %v121 = vld [vmem:[#allocation6 + $0x210] sm:$0xff]
    %v122 = vld [vmem:[#allocation6 + $0x218] sm:$0xff]
    %v123 = vld [vmem:[#allocation6 + $0x220] sm:$0xff]
    %v124 = vld [vmem:[#allocation6 + $0x228] sm:$0xff]
    %v125 = vld [vmem:[#allocation6 + $0x230] sm:$0xff]
    %v126 = vld [vmem:[#allocation6 + $0x238] sm:$0xff]
    %v127 = vld [vmem:[#allocation6 + $0x240] sm:$0xff]
    %v128 = vld [vmem:[#allocation6 + $0x248] sm:$0xff]
    %v129 = vld [vmem:[#allocation6 + $0x250] sm:$0xff]
    %v130 = vld [vmem:[#allocation6 + $0x258] sm:$0xff]
    %v131 = vld [vmem:[#allocation6 + $0x260] sm:$0xff]
    %v132 = vld [vmem:[#allocation6 + $0x268] sm:$0xff]
    %v133 = vld [vmem:[#allocation6 + $0x270] sm:$0xff]
    %v134 = vld [vmem:[#allocation6 + $0x278] sm:$0xff]
    %v135 = vld [vmem:[#allocation6 + $0x280] sm:$0xff]
    %v136 = vld [vmem:[#allocation6 + $0x288] sm:$0xff]
    %v137 = vld [vmem:[#allocation6 + $0x290] sm:$0xff]
    %v138 = vld [vmem:[#allocation6 + $0x298] sm:$0xff]
    %v139 = vld [vmem:[#allocation6 + $0x2a0] sm:$0xff]
    %v140 = vld [vmem:[#allocation6 + $0x2a8] sm:$0xff]
    %v141 = vld [vmem:[#allocation6 + $0x2b0] sm:$0xff]
    %v142 = vld [vmem:[#allocation6 + $0x2b8] sm:$0xff]
    %v143 = vld [vmem:[#allocation6 + $0x2c0] sm:$0xff]
    %v144 = vld [vmem:[#allocation6 + $0x2c8] sm:$0xff]
    %v145 = vld [vmem:[#allocation6 + $0x2d0] sm:$0xff]
    %v146 = vld [vmem:[#allocation6 + $0x2d8] sm:$0xff]
    %v147 = vld [vmem:[#allocation6 + $0x2e0] sm:$0xff]
    %v148 = vld [vmem:[#allocation6 + $0x2e8] sm:$0xff]
    %v149 = vld [vmem:[#allocation6 + $0x2f0] sm:$0xff]
    %v150 = vld [vmem:[#allocation6 + $0x2f8] sm:$0xff]
    %v151 = vld [vmem:[#allocation6 + $0x300] sm:$0xff]
    %v152 = vld [vmem:[#allocation6 + $0x308] sm:$0xff]
    %v153 = vld [vmem:[#allocation6 + $0x310] sm:$0xff]
    %v154 = vld [vmem:[#allocation6 + $0x318] sm:$0xff]
    %v155 = vld [vmem:[#allocation6 + $0x320] sm:$0xff]
    %v156 = vld [vmem:[#allocation6 + $0x328] sm:$0xff]
    %v157 = vld [vmem:[#allocation6 + $0x330] sm:$0xff]
    %v158 = vld [vmem:[#allocation6 + $0x338] sm:$0xff]
    %v159 = vld [vmem:[#allocation6 + $0x340] sm:$0xff]
    %v160 = vld [vmem:[#allocation6 + $0x348] sm:$0xff]
    %v161 = vld [vmem:[#allocation6 + $0x350] sm:$0xff]
    %v162 = vld [vmem:[#allocation6 + $0x358] sm:$0xff]
    %v163 = vld [vmem:[#allocation6 + $0x360] sm:$0xff]
    %v164 = vld [vmem:[#allocation6 + $0x368] sm:$0xff]
    %v165 = vld [vmem:[#allocation6 + $0x370] sm:$0xff]
    %v166 = vld [vmem:[#allocation6 + $0x378] sm:$0xff]
    %v167 = vld [vmem:[#allocation6 + $0x380] sm:$0xff]
    %v168 = vld [vmem:[#allocation6 + $0x388] sm:$0xff]
    %v169 = vld [vmem:[#allocation6 + $0x390] sm:$0xff]
    %v170 = vld [vmem:[#allocation6 + $0x398] sm:$0xff]
    %v171 = vld [vmem:[#allocation6 + $0x3a0] sm:$0xff]
    %v172 = vld [vmem:[#allocation6 + $0x3a8] sm:$0xff]
    %v173 = vld [vmem:[#allocation6 + $0x3b0] sm:$0xff]
    %v174 = vld [vmem:[#allocation6 + $0x3b8] sm:$0xff]
    %v175 = vld [vmem:[#allocation6 + $0x3c0] sm:$0xff]
    %v176 = vld [vmem:[#allocation6 + $0x3c8] sm:$0xff]
    %v177 = vld [vmem:[#allocation6 + $0x3d0] sm:$0xff]
    %v178 = vld [vmem:[#allocation6 + $0x3d8] sm:$0xff]
    %v179 = vld [vmem:[#allocation6 + $0x3e0] sm:$0xff]
    %v180 = vld [vmem:[#allocation6 + $0x3e8] sm:$0xff]
    %v181 = vld [vmem:[#allocation6 + $0x3f0] sm:$0xff]
    %v182 = vld [vmem:[#allocation6 + $0x3f8] sm:$0xff]
    %183 = vmatprep.subr.mxu0 %v176
    %184 = vmatpush1.xpose.msra.mxu0 %v175
    %185 = vmatprep.subr.mxu0 %v168
    %186 = vmatpush1.xpose.msra.mxu0 %v167
    %187 = vmatprep.subr.mxu0 %v160
    %188 = vmatpush1.xpose.msra.mxu0 %v159
    %189 = vmatprep.subr.mxu0 %v152
    %190 = vmatpush1.xpose.msra.mxu0 %v151
    %191 = vmatprep.subr.mxu0 %v144
    %192 = vmatpush1.xpose.msra.mxu0 %v143
    %193 = vmatprep.subr.mxu0 %v136
    %194 = vmatpush1.xpose.msra.mxu0 %v135
    %195 = vmatprep.subr.mxu0 %v128
    %196 = vmatpush1.xpose.msra.mxu0 %v127
    %197 = vmatprep.subr.mxu0 %v120
    %198 = vmatpush1.xpose.msra.mxu0 %v119
    %199 = vmatprep.subr.mxu0 %v112
    %200 = vmatpush1.xpose.msra.mxu0 %v111
    %201 = vmatprep.subr.mxu0 %v104
    %202 = vmatpush1.xpose.msra.mxu0 %v103
    %203 = vmatprep.subr.mxu0 %v96
    %204 = vmatpush1.xpose.msra.mxu0 %v95
    %205 = vmatprep.subr.mxu0 %v88
    %206 = vmatpush1.xpose.msra.mxu0 %v87
    %207 = vmatprep.subr.mxu0 %v80
    %208 = vmatpush1.xpose.msra.mxu0 %v79
    %209 = vmatprep.subr.mxu0 %v72
    %210 = vmatpush1.xpose.msra.mxu0 %v71
    %211 = vmatprep.subr.mxu0 %v64
    %212 = vmatpush1.xpose.msra.mxu0 %v63
    %213 = vmatprep.subr.mxu0 %v56
    %214 = vmatpush1.xpose.msra.mxu0 %v55
    %215 = vmatprep.subr.mxu0 0.0
    %216 = vmatpush2.xpose.msra.mxu0 0.0
    %217 = vmatprep.subr.mxu0 0.0
    %218 = vmatpush2.xpose.msra.mxu0 0.0
    %219 = vmatprep.subr.mxu0 0.0
    %220 = vmatpush2.xpose.msra.mxu0 0.0
    %221 = vmatprep.subr.mxu0 0.0
    %222 = vmatpush2.xpose.msra.mxu0 0.0
    %223 = vmatprep.subr.mxu0 0.0
    %224 = vmatpush2.xpose.msra.mxu0 0.0
    %225 = vmatprep.subr.mxu0 0.0
    %226 = vmatpush2.xpose.msra.mxu0 0.0
    %227 = vmatprep.subr.mxu0 0.0
    %228 = vmatpush2.xpose.msra.mxu0 0.0
    %229 = vmatprep.subr.mxu0 0.0
    %230 = vmatpush2.xpose.msra.mxu0 0.0
    %231 = vmatprep.subr.mxu0 0.0
    %232 = vmatpush2.xpose.msra.mxu0 0.0
    %233 = vmatprep.subr.mxu0 0.0
    %234 = vmatpush2.xpose.msra.mxu0 0.0
    %235 = vmatprep.subr.mxu0 0.0
    %236 = vmatpush2.xpose.msra.mxu0 0.0
    %237 = vmatprep.subr.mxu0 0.0
    %238 = vmatpush2.xpose.msra.mxu0 0.0
    %239 = vmatprep.subr.mxu0 0.0
    %240 = vmatpush2.xpose.msra.mxu0 0.0
    %241 = vmatprep.subr.mxu0 0.0
    %242 = vmatpush2.xpose.msra.mxu0 0.0
    %243 = vmatprep.subr.mxu0 0.0
    %244 = vmatpush2.xpose.msra.mxu0 0.0
    %245 = vmatprep.subr.mxu0 0.0
    %246 = vmatpush2.xpose.msra.mxu0 0.0
    %247 = vmatprep.mubr.f32.mxu0 %v48
    %248 = vmatmul.mubr.f32.gmra.mxu0 %v47
    %v249 = vpop.f32.mrf.mxu0
    %v250 = vadd.f32 0.0, %v249
    %v251 = vpop.f32.mrf.mxu0
    %252 = vdwg.mxu0
    %253 = vmatprep.subr.mxu0 %v178
    %254 = vmatpush1.xpose.msra.mxu0 %v177
    %255 = vmatprep.subr.mxu0 %v170
    %256 = vmatpush1.xpose.msra.mxu0 %v169
    %257 = vmatprep.subr.mxu0 %v162
    %258 = vmatpush1.xpose.msra.mxu0 %v161
    %259 = vmatprep.subr.mxu0 %v154
    %260 = vmatpush1.xpose.msra.mxu0 %v153
    %261 = vmatprep.subr.mxu0 %v146
    %262 = vmatpush1.xpose.msra.mxu0 %v145
    %263 = vmatprep.subr.mxu0 %v138
    %264 = vmatpush1.xpose.msra.mxu0 %v137
    %265 = vmatprep.subr.mxu0 %v130
    %266 = vmatpush1.xpose.msra.mxu0 %v129
    %267 = vmatprep.subr.mxu0 %v122
    %268 = vmatpush1.xpose.msra.mxu0 %v121
    %269 = vmatprep.subr.mxu0 %v114
    %270 = vmatpush1.xpose.msra.mxu0 %v113
    %271 = vmatprep.subr.mxu0 %v106
    %272 = vmatpush1.xpose.msra.mxu0 %v105
    %273 = vmatprep.subr.mxu0 %v98
    %274 = vmatpush1.xpose.msra.mxu0 %v97
    %275 = vmatprep.subr.mxu0 %v90
    %276 = vmatpush1.xpose.msra.mxu0 %v89
    %277 = vmatprep.subr.mxu0 %v82
    %278 = vmatpush1.xpose.msra.mxu0 %v81
    %279 = vmatprep.subr.mxu0 %v74
    %280 = vmatpush1.xpose.msra.mxu0 %v73
    %281 = vmatprep.subr.mxu0 %v66
    %282 = vmatpush1.xpose.msra.mxu0 %v65
    %283 = vmatprep.subr.mxu0 %v58
    %284 = vmatpush1.xpose.msra.mxu0 %v57
    %285 = vmatprep.subr.mxu0 0.0
    %286 = vmatpush2.xpose.msra.mxu0 0.0
    %287 = vmatprep.subr.mxu0 0.0
    %288 = vmatpush2.xpose.msra.mxu0 0.0
    %289 = vmatprep.subr.mxu0 0.0
    %290 = vmatpush2.xpose.msra.mxu0 0.0
    %291 = vmatprep.subr.mxu0 0.0
    %292 = vmatpush2.xpose.msra.mxu0 0.0
    %293 = vmatprep.subr.mxu0 0.0
    %294 = vmatpush2.xpose.msra.mxu0 0.0
    %295 = vmatprep.subr.mxu0 0.0
    %296 = vmatpush2.xpose.msra.mxu0 0.0
    %297 = vmatprep.subr.mxu0 0.0
    %298 = vmatpush2.xpose.msra.mxu0 0.0
    %299 = vmatprep.subr.mxu0 0.0
    %300 = vmatpush2.xpose.msra.mxu0 0.0
    %301 = vmatprep.subr.mxu0 0.0
    %302 = vmatpush2.xpose.msra.mxu0 0.0
    %303 = vmatprep.subr.mxu0 0.0
    %304 = vmatpush2.xpose.msra.mxu0 0.0
    %305 = vmatprep.subr.mxu0 0.0
    %306 = vmatpush2.xpose.msra.mxu0 0.0
    %307 = vmatprep.subr.mxu0 0.0
    %308 = vmatpush2.xpose.msra.mxu0 0.0
    %309 = vmatprep.subr.mxu0 0.0
    %310 = vmatpush2.xpose.msra.mxu0 0.0
    %311 = vmatprep.subr.mxu0 0.0
    %312 = vmatpush2.xpose.msra.mxu0 0.0
    %313 = vmatprep.subr.mxu0 0.0
    %314 = vmatpush2.xpose.msra.mxu0 0.0
    %315 = vmatprep.subr.mxu0 0.0
    %316 = vmatpush2.xpose.msra.mxu0 0.0
    %317 = vmatprep.mubr.f32.mxu0 %v50
    %318 = vmatmul.mubr.f32.gmra.mxu0 %v49
    %v319 = vpop.f32.mrf.mxu0
    %v320 = vadd.f32 %v250, %v319
    %v321 = vpop.f32.mrf.mxu0
    %322 = vdwg.mxu0
    %323 = vmatprep.subr.mxu0 %v180
    %324 = vmatpush1.xpose.msra.mxu0 %v179
    %325 = vmatprep.subr.mxu0 %v172
    %326 = vmatpush1.xpose.msra.mxu0 %v171
    %327 = vmatprep.subr.mxu0 %v164
    %328 = vmatpush1.xpose.msra.mxu0 %v163
    %329 = vmatprep.subr.mxu0 %v156
    %330 = vmatpush1.xpose.msra.mxu0 %v155
    %331 = vmatprep.subr.mxu0 %v148
    %332 = vmatpush1.xpose.msra.mxu0 %v147
    %333 = vmatprep.subr.mxu0 %v140
    %334 = vmatpush1.xpose.msra.mxu0 %v139
    %335 = vmatprep.subr.mxu0 %v132
    %336 = vmatpush1.xpose.msra.mxu0 %v131
    %337 = vmatprep.subr.mxu0 %v124
    %338 = vmatpush1.xpose.msra.mxu0 %v123
    %339 = vmatprep.subr.mxu0 %v116
    %340 = vmatpush1.xpose.msra.mxu0 %v115
    %341 = vmatprep.subr.mxu0 %v108
    %342 = vmatpush1.xpose.msra.mxu0 %v107
    %343 = vmatprep.subr.mxu0 %v100
    %344 = vmatpush1.xpose.msra.mxu0 %v99
    %345 = vmatprep.subr.mxu0 %v92
    %346 = vmatpush1.xpose.msra.mxu0 %v91
    %347 = vmatprep.subr.mxu0 %v84
    %348 = vmatpush1.xpose.msra.mxu0 %v83
    %349 = vmatprep.subr.mxu0 %v76
    %350 = vmatpush1.xpose.msra.mxu0 %v75
    %351 = vmatprep.subr.mxu0 %v68
    %352 = vmatpush1.xpose.msra.mxu0 %v67
    %353 = vmatprep.subr.mxu0 %v60
    %354 = vmatpush1.xpose.msra.mxu0 %v59
    %355 = vmatprep.subr.mxu0 0.0
    %356 = vmatpush2.xpose.msra.mxu0 0.0
    %357 = vmatprep.subr.mxu0 0.0
    %358 = vmatpush2.xpose.msra.mxu0 0.0
    %359 = vmatprep.subr.mxu0 0.0
    %360 = vmatpush2.xpose.msra.mxu0 0.0
    %361 = vmatprep.subr.mxu0 0.0
    %362 = vmatpush2.xpose.msra.mxu0 0.0
    %363 = vmatprep.subr.mxu0 0.0
    %364 = vmatpush2.xpose.msra.mxu0 0.0
    %365 = vmatprep.subr.mxu0 0.0
    %366 = vmatpush2.xpose.msra.mxu0 0.0
    %367 = vmatprep.subr.mxu0 0.0
    %368 = vmatpush2.xpose.msra.mxu0 0.0
    %369 = vmatprep.subr.mxu0 0.0
    %370 = vmatpush2.xpose.msra.mxu0 0.0
    %371 = vmatprep.subr.mxu0 0.0
    %372 = vmatpush2.xpose.msra.mxu0 0.0
    %373 = vmatprep.subr.mxu0 0.0
    %374 = vmatpush2.xpose.msra.mxu0 0.0
    %375 = vmatprep.subr.mxu0 0.0
    %376 = vmatpush2.xpose.msra.mxu0 0.0
    %377 = vmatprep.subr.mxu0 0.0
    %378 = vmatpush2.xpose.msra.mxu0 0.0
    %379 = vmatprep.subr.mxu0 0.0
    %380 = vmatpush2.xpose.msra.mxu0 0.0
    %381 = vmatprep.subr.mxu0 0.0
    %382 = vmatpush2.xpose.msra.mxu0 0.0
    %383 = vmatprep.subr.mxu0 0.0
    %384 = vmatpush2.xpose.msra.mxu0 0.0
    %385 = vmatprep.subr.mxu0 0.0
    %386 = vmatpush2.xpose.msra.mxu0 0.0
    %387 = vmatprep.mubr.f32.mxu0 %v52
    %388 = vmatmul.mubr.f32.gmra.mxu0 %v51
    %v389 = vpop.f32.mrf.mxu0
    %v390 = vadd.f32 %v320, %v389
    %v391 = vpop.f32.mrf.mxu0
    %392 = vdwg.mxu0
    %393 = vmatprep.subr.mxu0 %v182
    %394 = vmatpush1.xpose.msra.mxu0 %v181
    %395 = vmatprep.subr.mxu0 %v174
    %396 = vmatpush1.xpose.msra.mxu0 %v173
    %397 = vmatprep.subr.mxu0 %v166
    %398 = vmatpush1.xpose.msra.mxu0 %v165
    %399 = vmatprep.subr.mxu0 %v158
    %400 = vmatpush1.xpose.msra.mxu0 %v157
    %401 = vmatprep.subr.mxu0 %v150
    %402 = vmatpush1.xpose.msra.mxu0 %v149
    %403 = vmatprep.subr.mxu0 %v142
    %404 = vmatpush1.xpose.msra.mxu0 %v141
    %405 = vmatprep.subr.mxu0 %v134
    %406 = vmatpush1.xpose.msra.mxu0 %v133
    %407 = vmatprep.subr.mxu0 %v126
    %408 = vmatpush1.xpose.msra.mxu0 %v125
    %409 = vmatprep.subr.mxu0 %v118
    %410 = vmatpush1.xpose.msra.mxu0 %v117
    %411 = vmatprep.subr.mxu0 %v110
    %412 = vmatpush1.xpose.msra.mxu0 %v109
    %413 = vmatprep.subr.mxu0 %v102
    %414 = vmatpush1.xpose.msra.mxu0 %v101
    %415 = vmatprep.subr.mxu0 %v94
    %416 = vmatpush1.xpose.msra.mxu0 %v93
    %417 = vmatprep.subr.mxu0 %v86
    %418 = vmatpush1.xpose.msra.mxu0 %v85
    %419 = vmatprep.subr.mxu0 %v78
    %420 = vmatpush1.xpose.msra.mxu0 %v77
    %421 = vmatprep.subr.mxu0 %v70
    %422 = vmatpush1.xpose.msra.mxu0 %v69
    %423 = vmatprep.subr.mxu0 %v62
    %424 = vmatpush1.xpose.msra.mxu0 %v61
    %425 = vmatprep.subr.mxu0 0.0
    %426 = vmatpush2.xpose.msra.mxu0 0.0
    %427 = vmatprep.subr.mxu0 0.0
    %428 = vmatpush2.xpose.msra.mxu0 0.0
    %429 = vmatprep.subr.mxu0 0.0
    %430 = vmatpush2.xpose.msra.mxu0 0.0
    %431 = vmatprep.subr.mxu0 0.0
    %432 = vmatpush2.xpose.msra.mxu0 0.0
    %433 = vmatprep.subr.mxu0 0.0
    %434 = vmatpush2.xpose.msra.mxu0 0.0
    %435 = vmatprep.subr.mxu0 0.0
    %436 = vmatpush2.xpose.msra.mxu0 0.0
    %437 = vmatprep.subr.mxu0 0.0
    %438 = vmatpush2.xpose.msra.mxu0 0.0
    %439 = vmatprep.subr.mxu0 0.0
    %440 = vmatpush2.xpose.msra.mxu0 0.0
    %441 = vmatprep.subr.mxu0 0.0
    %442 = vmatpush2.xpose.msra.mxu0 0.0
    %443 = vmatprep.subr.mxu0 0.0
    %444 = vmatpush2.xpose.msra.mxu0 0.0
    %445 = vmatprep.subr.mxu0 0.0
    %446 = vmatpush2.xpose.msra.mxu0 0.0
    %447 = vmatprep.subr.mxu0 0.0
    %448 = vmatpush2.xpose.msra.mxu0 0.0
    %449 = vmatprep.subr.mxu0 0.0
    %450 = vmatpush2.xpose.msra.mxu0 0.0
    %451 = vmatprep.subr.mxu0 0.0
    %452 = vmatpush2.xpose.msra.mxu0 0.0
    %453 = vmatprep.subr.mxu0 0.0
    %454 = vmatpush2.xpose.msra.mxu0 0.0
    %455 = vmatprep.subr.mxu0 0.0
    %456 = vmatpush2.xpose.msra.mxu0 0.0
    %457 = vmatprep.mubr.f32.mxu0 %v54
    %458 = vmatmul.mubr.f32.gmra.mxu0 %v53
    %v459 = vpop.f32.mrf.mxu0
    %v460 = vadd.f32 %v390, %v459
    %v461 = vpop.f32.mrf.mxu0
    %462 = vdwg.mxu0
    %v463 = vadd.f32 %v46, %v460
    %464 = vst [vmem:[#allocation2] sm:$0xff] %v463
    // Predicated region
    $region26: #{tpu_custom_call.1} parent=1 // pred_check
      %p465 = pneg %p41
    $region27: #{tpu_custom_call.1} parent=1 // pred_check_branch
      %467 = sbr.rel (%p465) target = $region29
    $region28: #{tpu_custom_call.1} parent=1 // pred_region
      %v468 = vld [vmem:[#allocation2] sm:$0xff]
      %v469 = vld [vmem:[%s2] sm:$0x1]
      %v471 = vlaneseq
      %v472 = vshrl.u32 %v471, 7
      %v473 = vsub.s32 0, %v472
      %v474 = vrot.slane %v469, %v473
      %v476 = vadd.f32 %v468, %v474
      %477 = vst [vmem:[#allocation8] sm:$0xff] %v476
    $region29: #{tpu_custom_call.1} parent=1 // pred_fallthru
      _
    // Predicated region
    $region30: #{tpu_custom_call.1} parent=1 // pred_check
      _
    $region31: #{tpu_custom_call.1} parent=1 // pred_check_branch
      %479 = sbr.rel (0) target = $region33
    $region32: #{tpu_custom_call.1} parent=1 // pred_region
      %s481 = ssub.s32 128, 128
      %482 = vsyncadd [#allocation5], %s481
      %s484 = sshll.u32 [#allocation8], 4
      %s485 = int_to_ptr.vmem [resolvable:$true] %s484
      %487 = dma.vmem_to_hbm [thread:$0]  %s485, 128, %s3, [#allocation5]
    $region33: #{tpu_custom_call.1} parent=1 // pred_fallthru
      _
    // Predicated region
    $region34: #{tpu_custom_call.1} parent=1 // pred_check
      _
    $region35: #{tpu_custom_call.1} parent=1 // pred_check_branch
      %489 = sbr.rel (0) target = $region37
    $region36: #{tpu_custom_call.1} parent=1 // pred_region
      %490 = dma.done [#allocation5], 128
    $region37: #{tpu_custom_call.1} parent=1 // pred_fallthru
      _
    %491 = vsyncpa [#allocation4], 1
    %492 = vsyncpa [#allocation7], 1
    %493 = vsyncpa [#allocation5], 1

</llo_original>
